<compile_context>
chip_gen: v6e
topology: v6e:2x2x1
jax: 0.10.0
libtpu: 0.0.40
codegen_flags: <defaults>
</compile_context>

<pallas_src>
import jax
import jax.numpy as jnp
from jax.experimental import pallas as pl
from jax.experimental.pallas import tpu as pltpu

VERY_NEG_NUMBER = -100000000000.0


# ---------------------------------------------------------------------------
# Kernel 1: fused masked max + masked argmax over the last dimension
# ---------------------------------------------------------------------------
def _mask_reduce_kernel(values_ref, mask_ref, max_ref, argmax_ref):
    v = values_ref[...].astype(jnp.float32)                               # (TB, N)
    masked = jnp.where(mask_ref[...] != 0, v, jnp.float32(VERY_NEG_NUMBER))
    m = jnp.max(masked, axis=-1, keepdims=True)                           # (TB, 1)
    max_ref[...] = m.astype(max_ref.dtype)
    n = masked.shape[-1]
    # first index attaining the max (matches torch/jnp first-hit tie behaviour)
    # NOTE: a row containing NaN yields the sentinel `n` (documented caveat).
    idx = jax.lax.broadcasted_iota(jnp.int32, masked.shape, dimension=1)
    first_idx = jnp.min(jnp.where(masked == m, idx, jnp.int32(n)),
                        axis=-1, keepdims=True)
    argmax_ref[...] = first_idx


def _batch_tile(B, N, values_itemsize, mask_itemsize):
    """Rows per grid step: 2 inputs x 2 pipeline buffers, <=16 MiB live VMEM
    (leaves headroom for v7x's halved 64 MiB VMEM / 32 MiB scoped default)."""
    bytes_per_row = 2 * (values_itemsize + mask_itemsize) * max(N, 1)
    budget = 16 << 20
    tb = min(512, max(8, budget // bytes_per_row))
    tb = max(8, (tb // 8) * 8)
    if B <= tb:
        return B          # single full-size block (always a legal block shape)
    return tb


def _mask_reduce(values, mask):
    """Returns (masked_max (B,1) in values.dtype, masked_argmax (B,1) int32)."""
    B, N = values.shape
    if mask.dtype == jnp.bool_:
        mask = mask.astype(jnp.int8)   # keep HBM bytes narrow; kernel tests != 0
    tb = _batch_tile(B, N, values.dtype.itemsize, mask.dtype.itemsize)
    grid = (pl.cdiv(B, tb),)
    out_shapes = (
        jax.ShapeDtypeStruct((B, 1), values.dtype),
        jax.ShapeDtypeStruct((B, 1), jnp.int32),   # torch gives int64; int32 on TPU
    )
    return pl.pallas_call(
        _mask_reduce_kernel,
        out_shape=out_shapes,
        grid=grid,
        in_specs=[
            pl.BlockSpec((tb, N), lambda i: (i, 0)),
            pl.BlockSpec((tb, N), lambda i: (i, 0)),
        ],
        out_specs=(
            pl.BlockSpec((tb, 1), lambda i: (i, 0)),
            pl.BlockSpec((tb, 1), lambda i: (i, 0)),
        ),
        compiler_params=pltpu.CompilerParams(
            dimension_semantics=("parallel",)),   # batch tiles are independent
    )(values, mask)


# ---------------------------------------------------------------------------
# Kernel 2: get_node_emb — gather query_hidden_emb[b, action[b], :]
#   The gather happens in the index_map (Element-indexed BlockSpec using the
#   scalar-prefetched action), so only the selected row is DMA'd per step.
# ---------------------------------------------------------------------------
def _gather_kernel(action_ref, q_ref, o_ref):
    # q_ref already holds only the gathered row selected by the index_map.
    o_ref[...] = q_ref[...].reshape(o_ref.shape)


def get_node_emb_pallas(query_hidden_emb, action):
    B, M, E = query_hidden_emb.shape
    # TODO(synk): amortize per-step overhead further by packing several batch
    # rows per grid step once production B is known.
    grid_spec = pltpu.PrefetchScalarGridSpec(
        num_scalar_prefetch=1,
        grid=(B,),
        in_specs=[pl.BlockSpec((1, pl.Element(1), E),
                               lambda b, act: (b, act[b], 0))],
        out_specs=pl.BlockSpec((1, E), lambda b, act: (b, 0)),
    )
    return pl.pallas_call(
        _gather_kernel,
        out_shape=jax.ShapeDtypeStruct((B, E), query_hidden_emb.dtype),
        grid_spec=grid_spec,
        compiler_params=pltpu.CompilerParams(
            dimension_semantics=("parallel",)),   # rows are independent
    )(action.astype(jnp.int32), query_hidden_emb)


# ---------------------------------------------------------------------------
# Thin JAX-side mirror of the PyTorch BaseAgent API
# ---------------------------------------------------------------------------
class BaseAgentPallas:
    """No learnable parameters; forward() is a no-op in the reference module."""

    def __init__(self, num_entity=32, num_relation=8, num_word=100):
        self.num_entity = num_entity
        self.num_relation = num_relation
        self.num_word = num_word

    def forward(self, *args):
        # TODO(synk): reference forward() is `pass` — nothing to compute.
        return None

    @staticmethod
    def mask_max_argmax(values, mask):
        """Fused entry point: one kernel launch, one read of values+mask."""
        return _mask_reduce(values, mask)

    @staticmethod
    def mask_max(values, mask, keepdim=True):
        mx, _ = _mask_reduce(values, mask)
        return mx if keepdim else mx[:, 0]

    @staticmethod
    def mask_argmax(values, mask):
        return _mask_reduce(values, mask)[1]

    @staticmethod
    def get_node_emb(query_hidden_emb, action):
        return get_node_emb_pallas(query_hidden_emb, action)

    def query_mask(self, query_text):
        # deal_input_seq glue: (query_text != num_word).float()
        return (query_text != self.num_word).astype(jnp.float32)


if __name__ == "__main__":
    key = jax.random.PRNGKey(0)
    k1, k2, k3, k4 = jax.random.split(key, 4)

    B, M, E, N = 4, 8, 32, 16       # batch, max_hyper, emb, num_actions
    values = jax.random.normal(k1, (B, N), dtype=jnp.float32)
    mask = (jax.random.uniform(k2, (B, N)) > 0.3).astype(jnp.float32)
    mask = mask.at[:, 0].set(1.0)   # guarantee each row has a valid action
    query_hidden_emb = jax.random.normal(k3, (B, M, E), dtype=jnp.float32)
    action = jax.random.randint(k4, (B,), 0, M, dtype=jnp.int32)

    agent = BaseAgentPallas(num_entity=32, num_relation=8, num_word=100)

    mx, am = agent.mask_max_argmax(values, mask)     # fused: one launch
    node_emb = agent.get_node_emb(query_hidden_emb, action)
    jax.block_until_ready((mx, am, node_emb))

    # Pure-JAX references (same semantics as the PyTorch helpers)
    adj = values + (1.0 - mask) * VERY_NEG_NUMBER
    ref_max = jnp.max(adj, axis=-1, keepdims=True)
    ref_arg = jnp.argmax(adj, axis=-1, keepdims=True).astype(jnp.int32)
    ref_emb = query_hidden_emb[jnp.arange(B), action, :]

    assert jnp.allclose(mx, ref_max, atol=1e-5), "mask_max mismatch"
    assert jnp.array_equal(am, ref_arg), "mask_argmax mismatch"
    assert jnp.allclose(node_emb, ref_emb, atol=1e-6), "get_node_emb mismatch"

    # API sanity: individual helpers still match the fused result.
    assert jnp.allclose(agent.mask_max(values, mask), mx)
    assert jnp.array_equal(agent.mask_argmax(values, mask), am)

    print("KERNEL_OK")
</pallas_src>

<mosaic_0001>
module attributes {stable_mosaic.version = 11 : i64} {
  func.func @_mask_reduce_kernel(%arg0: i32, %arg1: memref<4x16xf32, #tpu.memory_space<vmem>>, %arg2: memref<4x16xf32, #tpu.memory_space<vmem>>, %arg3: memref<4x1xf32, #tpu.memory_space<vmem>>, %arg4: memref<4x1xi32, #tpu.memory_space<vmem>>) attributes {dimension_semantics = [#tpu.dimension_semantics<parallel>], iteration_bounds = array<i64: 1>, scalar_prefetch = 0 : i64, scratch_operands = 0 : i64, tpu.core_type = #tpu.core_type<tc>, window_params = [{transform_indices = @transform_0, window_bounds = array<i64: 4, 16>}, {transform_indices = @transform_1, window_bounds = array<i64: 4, 16>}, {transform_indices = @transform_2, window_bounds = array<i64: 4, 1>}, {transform_indices = @transform_3, window_bounds = array<i64: 4, 1>}]} {
    %c0 = arith.constant 0 : index
    %c0_0 = arith.constant 0 : index
    %0 = vector.load %arg1[%c0, %c0_0] : memref<4x16xf32, #tpu.memory_space<vmem>>, vector<4x16xf32>
    %c0_1 = arith.constant 0 : index
    %c0_2 = arith.constant 0 : index
    %1 = vector.load %arg2[%c0_1, %c0_2] : memref<4x16xf32, #tpu.memory_space<vmem>>, vector<4x16xf32>
    %cst = arith.constant 0.000000e+00 : f32
    %2 = vector.broadcast %cst : f32 to vector<4x16xf32>
    %3 = arith.cmpf one, %1, %2 : vector<4x16xf32>
    %cst_3 = arith.constant -9.99999979E+10 : f32
    %4 = vector.broadcast %cst_3 : f32 to vector<4x16xf32>
    %5 = arith.select %3, %0, %4 : vector<4x16xi1>, vector<4x16xf32>
    %cst_4 = arith.constant dense<0xFF800000> : vector<4xf32>
    %6 = vector.multi_reduction <maximumf>, %5, %cst_4 [1] : vector<4x16xf32> to vector<4xf32>
    %7 = vector.shape_cast %6 : vector<4xf32> to vector<4x1xf32>
    %c0_5 = arith.constant 0 : index
    %c0_6 = arith.constant 0 : index
    %8 = vector.load %arg3[%c0_5, %c0_6] : memref<4x1xf32, #tpu.memory_space<vmem>>, vector<4x1xf32>
    tpu.vector_store %arg3[%c0_5, %c0_6], %7 {strides = array<i32>} : memref<4x1xf32, #tpu.memory_space<vmem>>, vector<4x1xf32>,
    %9 = tpu.iota {dimensions = array<i32: 1>} : vector<4x16xi32>
    %10 = vector.broadcast %7 : vector<4x1xf32> to vector<4x16xf32>
    %11 = arith.cmpf oeq, %5, %10 : vector<4x16xf32>
    %c16_i32 = arith.constant 16 : i32
    %12 = vector.broadcast %c16_i32 : i32 to vector<4x16xi32>
    %13 = arith.select %11, %9, %12 : vector<4x16xi1>, vector<4x16xi32>
    %cst_7 = arith.constant dense<2147483647> : vector<4xi32>
    %14 = vector.multi_reduction <minsi>, %13, %cst_7 [1] : vector<4x16xi32> to vector<4xi32>
    %15 = vector.shape_cast %14 : vector<4xi32> to vector<4x1xi32>
    %c0_8 = arith.constant 0 : index
    %c0_9 = arith.constant 0 : index
    %16 = vector.load %arg4[%c0_8, %c0_9] : memref<4x1xi32, #tpu.memory_space<vmem>>, vector<4x1xi32>
    tpu.vector_store %arg4[%c0_8, %c0_9], %15 {strides = array<i32>} : memref<4x1xi32, #tpu.memory_space<vmem>>, vector<4x1xi32>,
    return
  }
  func.func @transform_0(%arg0: i32) -> (i32, i32) {
    %c0_i32 = arith.constant 0 : i32
    %c0_i32_0 = arith.constant 0 : i32
    return %arg0, %c0_i32 : i32, i32
  }
  func.func @transform_1(%arg0: i32) -> (i32, i32) {
    %c0_i32 = arith.constant 0 : i32
    %c0_i32_0 = arith.constant 0 : i32
    return %arg0, %c0_i32 : i32, i32
  }
  func.func @transform_2(%arg0: i32) -> (i32, i32) {
    %c0_i32 = arith.constant 0 : i32
    %c0_i32_0 = arith.constant 0 : i32
    return %arg0, %c0_i32 : i32, i32
  }
  func.func @transform_3(%arg0: i32) -> (i32, i32) {
    %c0_i32 = arith.constant 0 : i32
    %c0_i32_0 = arith.constant 0 : i32
    return %arg0, %c0_i32 : i32, i32
  }
}

</mosaic_0001>

<llo_original>
// kernel: tpu_custom_call.1
$region0: #{tpu_custom_call.1}
  #allocation0 [shape = 'u32[]', space=smem, size = 0x4, offset = 0x4, fixed_abs, tag = 'smem constant byte address 0x4 - core index']
  #allocation1 [shape = 'u32[144,128]{1,0:T(1,128)}', space=vmem, size = 0x12000, scoped, tag = 'internal scratch']
  %s0 = inlined_call_operand.hbm [shape: f32[4,16], index: 0, kind: input, shape index: {}]
  %s1 = inlined_call_operand.hbm [shape: f32[4,16], index: 1, kind: input, shape index: {}]
  %s2 = inlined_call_operand.vmem [shape: f32[4,1], index: 2, kind: output, shape index: {0}]
  %s3 = inlined_call_operand.vmem [shape: s32[4,1], index: 3, kind: output, shape index: {1}]
  %4 = xla_tuple %s2, %s3
  %s5 = sld [smem:[#allocation0]]
  $region34: #{tpu_custom_call.1} parent=0
    _
  %s7 = ssub.s32 1, %s5
  %s8 = scalar_select 0, %s7, %s5
  $region1: #{tpu_custom_call.1} parent=0
    #allocation2 [shape = 'u8[2048]{0}', space=vmem, size = 0x800, scoped, tag = 'input window, operand 0, single buffered']
    #allocation3 [shape = 's32[1]{0}', space=sflag, size = 0x4, scoped, tag = 'scoped memory for tpu_custom_call.1']
    #allocation4 [shape = 'u8[2048]{0}', space=vmem, size = 0x800, scoped, tag = 'input window, operand 1, single buffered']
    #allocation5 [shape = 's32[1]{0}', space=sflag, size = 0x4, scoped, tag = 'scoped memory for tpu_custom_call.1']
    %9 = vsyncpa [#allocation3], 0
    %10 = vsyncpa [#allocation5], 0
    // Predicated region
    $region2: #{tpu_custom_call.1} parent=1 // pred_check
      _
    $region3: #{tpu_custom_call.1} parent=1 // pred_check_branch
      %12 = sbr.rel (0) target = $region5
    $region4: #{tpu_custom_call.1} parent=1 // pred_region
      %s14 = ssub.s32 64, 64
      %15 = vsyncadd [#allocation3], %s14
      %s17 = sshll.u32 [#allocation2], 4
      %s18 = int_to_ptr.vmem [resolvable:$true] %s17
      %20 = dma.hbm_to_vmem [thread:$0]  %s0, 64, %s18, [#allocation3]
    $region5: #{tpu_custom_call.1} parent=1 // pred_fallthru
      _
    // Predicated region
    $region6: #{tpu_custom_call.1} parent=1 // pred_check
      _
    $region7: #{tpu_custom_call.1} parent=1 // pred_check_branch
      %22 = sbr.rel (0) target = $region9
    $region8: #{tpu_custom_call.1} parent=1 // pred_region
      %s24 = ssub.s32 64, 64
      %25 = vsyncadd [#allocation5], %s24
      %s27 = sshll.u32 [#allocation4], 4
      %s28 = int_to_ptr.vmem [resolvable:$true] %s27
      %30 = dma.hbm_to_vmem [thread:$0]  %s1, 64, %s28, [#allocation5]
    $region9: #{tpu_custom_call.1} parent=1 // pred_fallthru
      _
    // Predicated region
    $region10: #{tpu_custom_call.1} parent=1 // pred_check
      _
    $region11: #{tpu_custom_call.1} parent=1 // pred_check_branch
      %32 = sbr.rel (0) target = $region13
    $region12: #{tpu_custom_call.1} parent=1 // pred_region
      %33 = dma.done [#allocation3], 64
    $region13: #{tpu_custom_call.1} parent=1 // pred_fallthru
      _
    // Predicated region
    $region14: #{tpu_custom_call.1} parent=1 // pred_check
      _
    $region15: #{tpu_custom_call.1} parent=1 // pred_check_branch
      %35 = sbr.rel (0) target = $region17
    $region16: #{tpu_custom_call.1} parent=1 // pred_region
      %36 = dma.done [#allocation5], 64
    $region17: #{tpu_custom_call.1} parent=1 // pred_fallthru
      _
    %v37 = vld [vmem:[#allocation2] sm:$0xf]
    %v38 = vld [vmem:[#allocation4] sm:$0xf]
    %vm39 = vcmp.ne.f32.partialorder %v38, 0.0
    %v40 = vsel %vm39, %v37, -1e+11
    %vm41 = vcmask 125952
    %v42 = vsel %vm41, %v40, -inf
    %43 = vmax.xlane.f32.xlu0 %v42
    %v44 = vpop.xlane.xlu0 %43
    %vm45 = vcmask 3072
    %46 = vst.msk [vmem:[%s2] sm:$0xf] %vm45, %v44
    %v47 = vlaneseq
    %v48 = vand.u32 %v47, 127
    %vm49 = vcmp.eq.f32.partialorder %v40, %v44
    %v50 = vsel %vm49, %v48, 16
    %v51 = vsel %vm41, %v50, 2147483647
    %v52 = vand.u32 %v51, 65535
    %v53 = vshra.s32 %v51, 16
    %v54 = vcvt.s32.f32 %v52
    %v55 = vcvt.s32.f32 %v53
    %56 = vmin.xlane.f32.xlu0 %v55
    %v57 = vpop.xlane.xlu0 %56
    %vm58 = vcmp.eq.f32.partialorder %v55, %v57
    %v59 = vsel %vm58, %v54, inf
    %60 = vmin.xlane.f32.xlu0 %v59
    %v61 = vpop.xlane.xlu0 %60
    %v62 = vcvt.f32.s32 %v61
    %v63 = vcvt.f32.s32 %v57
    %v64 = vshll.u32 %v63, 16
    %v65 = vadd.s32 %v64, %v62
    %66 = vst.msk [vmem:[%s3] sm:$0xf] %vm45, %v65
    // Predicated region
    $region18: #{tpu_custom_call.1} parent=1 // pred_check
      _
    $region19: #{tpu_custom_call.1} parent=1 // pred_check_branch
      %68 = sbr.rel (0) target = $region21
    $region20: #{tpu_custom_call.1} parent=1 // pred_region
      _
    $region21: #{tpu_custom_call.1} parent=1 // pred_fallthru
      _
    // Predicated region
    $region22: #{tpu_custom_call.1} parent=1 // pred_check
      _
    $region23: #{tpu_custom_call.1} parent=1 // pred_check_branch
      %70 = sbr.rel (0) target = $region25
    $region24: #{tpu_custom_call.1} parent=1 // pred_region
      _
    $region25: #{tpu_custom_call.1} parent=1 // pred_fallthru
      _
    // Predicated region
    $region26: #{tpu_custom_call.1} parent=1 // pred_check
      _
    $region27: #{tpu_custom_call.1} parent=1 // pred_check_branch
      %72 = sbr.rel (0) target = $region29
    $region28: #{tpu_custom_call.1} parent=1 // pred_region
      _
    $region29: #{tpu_custom_call.1} parent=1 // pred_fallthru
      _
    // Predicated region
    $region30: #{tpu_custom_call.1} parent=1 // pred_check
      _
    $region31: #{tpu_custom_call.1} parent=1 // pred_check_branch
      %74 = sbr.rel (0) target = $region33
    $region32: #{tpu_custom_call.1} parent=1 // pred_region
      _
    $region33: #{tpu_custom_call.1} parent=1 // pred_fallthru
      _
    %75 = vsyncpa [#allocation3], 1
    %76 = vsyncpa [#allocation5], 1

</llo_original>
